<compile_context>
chip_gen: v7x
topology: tpu7x:2x2x1
jax: 0.10.0
libtpu: 0.0.40
codegen_flags: <defaults>
</compile_context>

<pallas_src>
import jax
import jax.numpy as jnp
from jax.experimental import pallas as pl
from jax.experimental.pallas import tpu as pltpu


def _round_up(x: int, m: int) -> int:
    return ((x + m - 1) // m) * m


def basic_encoder_kernel(x_ref, w1_ref, b1_ref, w2_ref, b2_ref, w3_ref, b3_ref, o_ref):
    # linear1 + relu (bf16 operands, f32 accumulate, f32 bias)
    h1 = jnp.dot(x_ref[...], w1_ref[...], preferred_element_type=jnp.float32) + b1_ref[...]
    h1 = jnp.maximum(h1, 0.0).astype(jnp.bfloat16)
    # linear2 + relu
    h2 = jnp.dot(h1, w2_ref[...], preferred_element_type=jnp.float32) + b2_ref[...]
    h2 = jnp.maximum(h2, 0.0).astype(jnp.bfloat16)
    # output layer (no activation); lane-dense (128-padded) output tile
    o_ref[...] = (jnp.dot(h2, w3_ref[...], preferred_element_type=jnp.float32)
                  + b3_ref[...]).astype(o_ref.dtype)


def basic_encoder(x, w1, b1, w2, b2, w3, b3, *, batch_tile=1024):
    B, n_bands = x.shape
    h1_dim = w1.shape[1]
    h2_dim = w2.shape[1]
    n_classes = w3.shape[1]

    # --- lane-dense output: pad class dim up to a multiple of 128 ---
    n_out = _round_up(max(n_classes, 128), 128)
    w3p = jnp.zeros((h2_dim, n_out), jnp.float32).at[:, :n_classes].set(w3)
    b3p = jnp.zeros((1, n_out), jnp.float32).at[:, :n_classes].set(b3)

    # --- bf16 matmul operands (biases stay f32; accumulation is f32 in-kernel) ---
    x_bf = x.astype(jnp.bfloat16)
    w1_bf = w1.astype(jnp.bfloat16)
    w2_bf = w2.astype(jnp.bfloat16)
    w3_bf = w3p.astype(jnp.bfloat16)

    # --- batch tiling: large tiles for big batches, single step for small ones ---
    if B <= batch_tile:
        tile = _round_up(B, 16)          # bf16 sublane packing granularity
    else:
        tile = batch_tile
    Bp = _round_up(B, tile)
    if Bp != B:
        x_bf = jnp.pad(x_bf, ((0, Bp - B), (0, 0)))  # zero rows; results discarded

    grid = (Bp // tile,)

    out_padded = pl.pallas_call(
        basic_encoder_kernel,
        out_shape=jax.ShapeDtypeStruct((Bp, n_out), jnp.float32),
        grid_spec=pl.GridSpec(
            grid=grid,
            in_specs=[
                pl.BlockSpec((tile, n_bands),     lambda i: (i, 0)),  # x tile over batch
                pl.BlockSpec((n_bands, h1_dim),   lambda i: (0, 0)),  # w1 (full, resident)
                pl.BlockSpec((1, h1_dim),         lambda i: (0, 0)),  # b1 (f32)
                pl.BlockSpec((h1_dim, h2_dim),    lambda i: (0, 0)),  # w2 (full)
                pl.BlockSpec((1, h2_dim),         lambda i: (0, 0)),  # b2 (f32)
                pl.BlockSpec((h2_dim, n_out),     lambda i: (0, 0)),  # w3 (128-padded cols)
                pl.BlockSpec((1, n_out),          lambda i: (0, 0)),  # b3 (128-padded)
            ],
            out_specs=pl.BlockSpec((tile, n_out), lambda i: (i, 0)),  # lane-dense output
        ),
        compiler_params=pltpu.CompilerParams(
            dimension_semantics=("parallel",),   # batch axis shards across TCs on v7x
        ),
    )(x_bf, w1_bf, b1, w2_bf, b2, w3_bf, b3p)

    # strip padding (batch rows + class lanes)
    return out_padded[:B, :n_classes]


def init_linear(key, fan_in, fan_out):
    # PyTorch nn.Linear default init: U(-1/sqrt(fan_in), 1/sqrt(fan_in)) for weight & bias.
    kw, kb = jax.random.split(key)
    bound = 1.0 / jnp.sqrt(jnp.float32(fan_in))
    # Stored transposed: (in_features, out_features) for x @ W.
    w = jax.random.uniform(kw, (fan_in, fan_out), jnp.float32, -bound, bound)
    b = jax.random.uniform(kb, (1, fan_out), jnp.float32, -bound, bound)
    return w, b


if __name__ == "__main__":
    # Small shapes consistent with the module defaults.
    n_bands = 32
    n_endmembers = 4
    l_n = 10
    n_classes = 9
    batch = 16

    h1_dim = l_n * n_endmembers   # 40
    h2_dim = n_endmembers         # 4

    key = jax.random.PRNGKey(0)
    kx, k1, k2, k3 = jax.random.split(key, 4)

    x = jax.random.normal(kx, (batch, n_bands), jnp.float32)
    w1, b1 = init_linear(k1, n_bands, h1_dim)
    w2, b2 = init_linear(k2, h1_dim, h2_dim)
    w3, b3 = init_linear(k3, h2_dim, n_classes)

    out = basic_encoder(x, w1, b1, w2, b2, w3, b3)
    out = jax.block_until_ready(out)
    assert out.shape == (batch, n_classes)

    # Reference with the same bf16-operand / f32-accumulate math as the kernel.
    xb, w1b, w2b, w3b = (a.astype(jnp.bfloat16) for a in (x, w1, w2, w3))
    ref = jnp.dot(xb, w1b, preferred_element_type=jnp.float32) + b1
    ref = jnp.maximum(ref, 0.0).astype(jnp.bfloat16)
    ref = jnp.dot(ref, w2b, preferred_element_type=jnp.float32) + b2
    ref = jnp.maximum(ref, 0.0).astype(jnp.bfloat16)
    ref = jnp.dot(ref, w3b, preferred_element_type=jnp.float32) + b3
    assert jnp.allclose(out, ref, atol=1e-3, rtol=1e-3), "mismatch vs reference"

    print("KERNEL_OK")
</pallas_src>

<mosaic_0001>
module attributes {stable_mosaic.version = 11 : i64} {
  func.func @basic_encoder_kernel(%arg0: i32, %arg1: memref<16x32xbf16, #tpu.memory_space<vmem>>, %arg2: memref<32x40xbf16, #tpu.memory_space<vmem>>, %arg3: memref<1x40xf32, #tpu.memory_space<vmem>>, %arg4: memref<40x4xbf16, #tpu.memory_space<vmem>>, %arg5: memref<1x4xf32, #tpu.memory_space<vmem>>, %arg6: memref<4x128xbf16, #tpu.memory_space<vmem>>, %arg7: memref<1x128xf32, #tpu.memory_space<vmem>>, %arg8: memref<16x128xf32, #tpu.memory_space<vmem>>) attributes {dimension_semantics = [#tpu.dimension_semantics<parallel>], iteration_bounds = array<i64: 1>, scalar_prefetch = 0 : i64, scratch_operands = 0 : i64, tpu.core_type = #tpu.core_type<tc>, window_params = [{transform_indices = @transform_0, window_bounds = array<i64: 16, 32>}, {pipeline_mode = #tpu.pipeline_mode<synchronous>, transform_indices = @transform_1, window_bounds = array<i64: 32, 40>}, {pipeline_mode = #tpu.pipeline_mode<synchronous>, transform_indices = @transform_2, window_bounds = array<i64: 1, 40>}, {pipeline_mode = #tpu.pipeline_mode<synchronous>, transform_indices = @transform_3, window_bounds = array<i64: 40, 4>}, {pipeline_mode = #tpu.pipeline_mode<synchronous>, transform_indices = @transform_4, window_bounds = array<i64: 1, 4>}, {pipeline_mode = #tpu.pipeline_mode<synchronous>, transform_indices = @transform_5, window_bounds = array<i64: 4, 128>}, {pipeline_mode = #tpu.pipeline_mode<synchronous>, transform_indices = @transform_6, window_bounds = array<i64: 1, 128>}, {transform_indices = @transform_7, window_bounds = array<i64: 16, 128>}]} {
    %c0 = arith.constant 0 : index
    %c0_0 = arith.constant 0 : index
    %0 = vector.load %arg1[%c0, %c0_0] : memref<16x32xbf16, #tpu.memory_space<vmem>>, vector<16x32xbf16>
    %c0_1 = arith.constant 0 : index
    %c0_2 = arith.constant 0 : index
    %1 = vector.load %arg2[%c0_1, %c0_2] : memref<32x40xbf16, #tpu.memory_space<vmem>>, vector<32x40xbf16>
    %cst = arith.constant dense<0.000000e+00> : vector<16x40xf32>
    %2 = tpu.matmul %0, %1, %cst {dimension_numbers = #tpu.dot_dimension_numbers<[1], [0], [0], [1], [0, 0, 1, 1], [], []>} : vector<16x32xbf16>, vector<32x40xbf16>, vector<16x40xf32> -> vector<16x40xf32>
    %c0_3 = arith.constant 0 : index
    %c0_4 = arith.constant 0 : index
    %3 = vector.load %arg3[%c0_3, %c0_4] : memref<1x40xf32, #tpu.memory_space<vmem>>, vector<1x40xf32>
    %4 = vector.broadcast %3 : vector<1x40xf32> to vector<16x40xf32>
    %5 = arith.addf %2, %4 : vector<16x40xf32>
    %cst_5 = arith.constant 0.000000e+00 : f32
    %6 = vector.broadcast %cst_5 : f32 to vector<16x40xf32>
    %7 = arith.maximumf %5, %6 : vector<16x40xf32>
    %8 = arith.truncf %7 : vector<16x40xf32> to vector<16x40xbf16>
    %c0_6 = arith.constant 0 : index
    %c0_7 = arith.constant 0 : index
    %9 = vector.load %arg4[%c0_6, %c0_7] : memref<40x4xbf16, #tpu.memory_space<vmem>>, vector<40x4xbf16>
    %cst_8 = arith.constant dense<0.000000e+00> : vector<16x4xf32>
    %10 = tpu.matmul %8, %9, %cst_8 {dimension_numbers = #tpu.dot_dimension_numbers<[1], [0], [0], [1], [0, 0, 1, 1], [], []>} : vector<16x40xbf16>, vector<40x4xbf16>, vector<16x4xf32> -> vector<16x4xf32>
    %c0_9 = arith.constant 0 : index
    %c0_10 = arith.constant 0 : index
    %11 = vector.load %arg5[%c0_9, %c0_10] : memref<1x4xf32, #tpu.memory_space<vmem>>, vector<1x4xf32>
    %12 = vector.broadcast %11 : vector<1x4xf32> to vector<16x4xf32>
    %13 = arith.addf %10, %12 : vector<16x4xf32>
    %cst_11 = arith.constant 0.000000e+00 : f32
    %14 = vector.broadcast %cst_11 : f32 to vector<16x4xf32>
    %15 = arith.maximumf %13, %14 : vector<16x4xf32>
    %16 = arith.truncf %15 : vector<16x4xf32> to vector<16x4xbf16>
    %c0_12 = arith.constant 0 : index
    %c0_13 = arith.constant 0 : index
    %17 = vector.load %arg6[%c0_12, %c0_13] : memref<4x128xbf16, #tpu.memory_space<vmem>>, vector<4x128xbf16>
    %cst_14 = arith.constant dense<0.000000e+00> : vector<16x128xf32>
    %18 = tpu.matmul %16, %17, %cst_14 {dimension_numbers = #tpu.dot_dimension_numbers<[1], [0], [0], [1], [0, 0, 1, 1], [], []>} : vector<16x4xbf16>, vector<4x128xbf16>, vector<16x128xf32> -> vector<16x128xf32>
    %c0_15 = arith.constant 0 : index
    %c0_16 = arith.constant 0 : index
    %19 = vector.load %arg7[%c0_15, %c0_16] : memref<1x128xf32, #tpu.memory_space<vmem>>, vector<1x128xf32>
    %20 = vector.broadcast %19 : vector<1x128xf32> to vector<16x128xf32>
    %21 = arith.addf %18, %20 : vector<16x128xf32>
    %c0_17 = arith.constant 0 : index
    %c0_18 = arith.constant 0 : index
    %22 = vector.load %arg8[%c0_17, %c0_18] : memref<16x128xf32, #tpu.memory_space<vmem>>, vector<16x128xf32>
    tpu.vector_store %arg8[%c0_17, %c0_18], %21 {strides = array<i32>} : memref<16x128xf32, #tpu.memory_space<vmem>>, vector<16x128xf32>,
    return
  }
  func.func @transform_0(%arg0: i32) -> (i32, i32) {
    %c0_i32 = arith.constant 0 : i32
    %c0_i32_0 = arith.constant 0 : i32
    return %arg0, %c0_i32 : i32, i32
  }
  func.func @transform_1(%arg0: i32) -> (i32, i32) {
    %c0_i32 = arith.constant 0 : i32
    %c0_i32_0 = arith.constant 0 : i32
    %c0_i32_1 = arith.constant 0 : i32
    return %c0_i32, %c0_i32_0 : i32, i32
  }
  func.func @transform_2(%arg0: i32) -> (i32, i32) {
    %c0_i32 = arith.constant 0 : i32
    %c0_i32_0 = arith.constant 0 : i32
    %c0_i32_1 = arith.constant 0 : i32
    return %c0_i32, %c0_i32_0 : i32, i32
  }
  func.func @transform_3(%arg0: i32) -> (i32, i32) {
    %c0_i32 = arith.constant 0 : i32
    %c0_i32_0 = arith.constant 0 : i32
    %c0_i32_1 = arith.constant 0 : i32
    return %c0_i32, %c0_i32_0 : i32, i32
  }
  func.func @transform_4(%arg0: i32) -> (i32, i32) {
    %c0_i32 = arith.constant 0 : i32
    %c0_i32_0 = arith.constant 0 : i32
    %c0_i32_1 = arith.constant 0 : i32
    return %c0_i32, %c0_i32_0 : i32, i32
  }
  func.func @transform_5(%arg0: i32) -> (i32, i32) {
    %c0_i32 = arith.constant 0 : i32
    %c0_i32_0 = arith.constant 0 : i32
    %c0_i32_1 = arith.constant 0 : i32
    return %c0_i32, %c0_i32_0 : i32, i32
  }
  func.func @transform_6(%arg0: i32) -> (i32, i32) {
    %c0_i32 = arith.constant 0 : i32
    %c0_i32_0 = arith.constant 0 : i32
    %c0_i32_1 = arith.constant 0 : i32
    return %c0_i32, %c0_i32_0 : i32, i32
  }
  func.func @transform_7(%arg0: i32) -> (i32, i32) {
    %c0_i32 = arith.constant 0 : i32
    %c0_i32_0 = arith.constant 0 : i32
    return %arg0, %c0_i32 : i32, i32
  }
}

</mosaic_0001>

<llo_original>
// kernel: tpu_custom_call.1
$region0: #{tpu_custom_call.1}
  #allocation0 [shape = 'u32[]', space=smem, size = 0x4, offset = 0x4, fixed_abs, tag = 'smem constant byte address 0x4 - core index']
  #allocation1 [shape = 'u32[144,128]{1,0:T(1,128)}', space=vmem, size = 0x12000, scoped, tag = 'internal scratch']
  %s0 = inlined_call_operand.vmem [shape: bf16[16,32], index: 0, kind: input, shape index: {}]
  %s1 = inlined_call_operand.vmem [shape: bf16[32,40], index: 1, kind: input, shape index: {}]
  %s2 = inlined_call_operand.vmem [shape: f32[1,40], index: 2, kind: input, shape index: {}]
  %s3 = inlined_call_operand.vmem [shape: bf16[40,4], index: 3, kind: input, shape index: {}]
  %s4 = inlined_call_operand.vmem [shape: f32[1,4], index: 4, kind: input, shape index: {}]
  %s5 = inlined_call_operand.vmem [shape: bf16[4,128], index: 5, kind: input, shape index: {}]
  %s6 = inlined_call_operand.vmem [shape: f32[1,128], index: 6, kind: input, shape index: {}]
  %s7 = inlined_call_operand.hbm [shape: f32[16,128], index: 7, kind: output, shape index: {}]
  %s8 = sld [smem:[#allocation0]]
  $region38: #{tpu_custom_call.1} parent=0
    _
  %s10 = ssub.s32 1, %s8
  %s11 = scalar_select 0, %s10, %s8
  $region1: #{tpu_custom_call.1} parent=0
    #allocation2 [shape = 'u8[8192]{0}', space=vmem, size = 0x2000, scoped, tag = 'output window, operand 0, single buffered']
    #allocation3 [shape = 's32[1]{0}', space=sflag, size = 0x4, scoped, tag = 'scoped memory for tpu_custom_call.1']
    %12 = vsyncpa [#allocation3], 0
    // Predicated region
    $region2: #{tpu_custom_call.1} parent=1 // pred_check
      _
    $region3: #{tpu_custom_call.1} parent=1 // pred_check_branch
      %14 = sbr.rel (0) target = $region5
    $region4: #{tpu_custom_call.1} parent=1 // pred_region
      _
    $region5: #{tpu_custom_call.1} parent=1 // pred_fallthru
      _
    // Predicated region
    $region6: #{tpu_custom_call.1} parent=1 // pred_check
      _
    $region7: #{tpu_custom_call.1} parent=1 // pred_check_branch
      %16 = sbr.rel (0) target = $region9
    $region8: #{tpu_custom_call.1} parent=1 // pred_region
      _
    $region9: #{tpu_custom_call.1} parent=1 // pred_fallthru
      _
    // Predicated region
    $region10: #{tpu_custom_call.1} parent=1 // pred_check
      _
    $region11: #{tpu_custom_call.1} parent=1 // pred_check_branch
      %18 = sbr.rel (0) target = $region13
    $region12: #{tpu_custom_call.1} parent=1 // pred_region
      _
    $region13: #{tpu_custom_call.1} parent=1 // pred_fallthru
      _
    // Predicated region
    $region14: #{tpu_custom_call.1} parent=1 // pred_check
      _
    $region15: #{tpu_custom_call.1} parent=1 // pred_check_branch
      %20 = sbr.rel (0) target = $region17
    $region16: #{tpu_custom_call.1} parent=1 // pred_region
      _
    $region17: #{tpu_custom_call.1} parent=1 // pred_fallthru
      _
    // Predicated region
    $region18: #{tpu_custom_call.1} parent=1 // pred_check
      _
    $region19: #{tpu_custom_call.1} parent=1 // pred_check_branch
      %22 = sbr.rel (0) target = $region21
    $region20: #{tpu_custom_call.1} parent=1 // pred_region
      _
    $region21: #{tpu_custom_call.1} parent=1 // pred_fallthru
      _
    // Predicated region
    $region22: #{tpu_custom_call.1} parent=1 // pred_check
      _
    $region23: #{tpu_custom_call.1} parent=1 // pred_check_branch
      %24 = sbr.rel (0) target = $region25
    $region24: #{tpu_custom_call.1} parent=1 // pred_region
      _
    $region25: #{tpu_custom_call.1} parent=1 // pred_fallthru
      _
    // Predicated region
    $region26: #{tpu_custom_call.1} parent=1 // pred_check
      _
    $region27: #{tpu_custom_call.1} parent=1 // pred_check_branch
      %26 = sbr.rel (0) target = $region29
    $region28: #{tpu_custom_call.1} parent=1 // pred_region
      _
    $region29: #{tpu_custom_call.1} parent=1 // pred_fallthru
      _
    %v28 = vld [vmem:[%s0] sm:$0xf]
    %v29 = vld [vmem:[%s0 + $0x4] sm:$0xf]
    %v30 = vld [vmem:[%s1] sm:$0xf]
    %v31 = vld [vmem:[%s1 + $0x4] sm:$0xf]
    %v32 = vld [vmem:[%s1 + $0x8] sm:$0xf]
    %v33 = vld [vmem:[%s1 + $0xc] sm:$0xf]
    %v34 = vld [vmem:[%s2] sm:$0x1]
    %v36 = vlaneseq
    %v37 = vshrl.u32 %v36, 7
    %v38 = vsub.s32 0, %v37
    %v39 = vrot.slane %v34, %v38
    %v43 = vunpack.c.l.b16 %v28
    %v44 = vunpack.c.l.b16 %v29
    %v45 = vpack.c.b16 %v44, %v43
    %v50 = vunpack.c.l.b16 %v30
    %v51 = vunpack.c.l.b16 %v31
    %v52 = vunpack.c.l.b16 %v32
    %v53 = vunpack.c.l.b16 %v33
    %v54 = vpack.c.b16 %v51, %v50
    %v55 = vpack.c.b16 %v53, %v52
    %vm58 = vcmask 261120
    %v60 = vsel %vm58, %v45, 0
    %62 = vmatprep.subr.bf16.mxu0 0
    %63 = vmatpush1.bf16.msra.mxu0 %v54
    %64 = vmatprep.subr.bf16.mxu0 0
    %65 = vmatpush1.bf16.msra.mxu0 %v55
    %66 = vmatprep.subr.bf16.mxu0 0
    %67 = vmatpush1.bf16.msra.mxu0 0
    %68 = vmatprep.subr.bf16.mxu0 0
    %69 = vmatpush1.bf16.msra.mxu0 0
    %70 = vmatprep.subr.bf16.mxu0 0
    %71 = vmatpush1.bf16.msra.mxu0 0
    %72 = vmatprep.subr.bf16.mxu0 0
    %73 = vmatpush1.bf16.msra.mxu0 0
    %74 = vmatprep.subr.bf16.mxu0 0
    %75 = vmatpush1.bf16.msra.mxu0 0
    %76 = vmatprep.subr.bf16.mxu0 0
    %77 = vmatpush1.bf16.msra.mxu0 0
    %78 = vmatprep.subr.bf16.mxu0 0
    %79 = vmatpush1.bf16.msra.mxu0 0
    %80 = vmatprep.subr.bf16.mxu0 0
    %81 = vmatpush1.bf16.msra.mxu0 0
    %82 = vmatprep.subr.bf16.mxu0 0
    %83 = vmatpush1.bf16.msra.mxu0 0
    %84 = vmatprep.subr.bf16.mxu0 0
    %85 = vmatpush1.bf16.msra.mxu0 0
    %86 = vmatprep.subr.bf16.mxu0 0
    %87 = vmatpush1.bf16.msra.mxu0 0
    %88 = vmatprep.subr.bf16.mxu0 0
    %89 = vmatpush1.bf16.msra.mxu0 0
    %90 = vmatprep.subr.bf16.mxu0 0
    %91 = vmatpush1.bf16.msra.mxu0 0
    %92 = vmatprep.subr.bf16.mxu0 0
    %93 = vmatpush1.bf16.msra.mxu0 0
    %94 = vmatprep.mubr.bf16.mxu0 0
    %95 = vmatmul.mubr.bf16.gmra.mrb[0].mxu0 %v60
    %v96 = vpop.f32.mrb[0].mxu0
    %v97 = vadd.f32 %v39, %v96
    %v98 = vpop.f32.mrb[0].mxu0
    %v99 = vpop.f32.mrb[0].mxu0
    %v100 = vadd.f32 %v39, %v99
    %v101 = vpop.f32.mrb[0].mxu0
    %102 = vdwg.mxu0
    %v103 = vmax.f32 %v97, 0.0
    %v104 = vmax.f32 %v100, 0.0
    %v105 = vpack.c.bf16 %v104, %v103
    %v106 = vld [vmem:[%s3] sm:$0xf]
    %v107 = vld [vmem:[%s3 + $0x4] sm:$0xf]
    %v108 = vld [vmem:[%s3 + $0x8] sm:$0xf]
    %v109 = vld [vmem:[%s3 + $0xc] sm:$0xf]
    %v110 = vld [vmem:[%s3 + $0x10] sm:$0xf]
    %v111 = vld [vmem:[%s4] sm:$0x1]
    %v113 = vlaneseq
    %v114 = vshrl.u32 %v113, 7
    %v115 = vsub.s32 0, %v114
    %v116 = vrot.slane %v111, %v115
    %v123 = vunpack.c.l.b16 %v106
    %v124 = vunpack.c.l.b16 %v107
    %v125 = vunpack.c.l.b16 %v108
    %v126 = vunpack.c.l.b16 %v109
    %v127 = vunpack.c.l.b16 %v110
    %v128 = vpack.c.b16 %v124, %v123
    %v129 = vpack.c.b16 %v126, %v125
    %v130 = vpack.c.b16 %v127, %v127
    %vm133 = vcmask 326656
    %v135 = vsel %vm133, %v105, 0
    %vm137 = vcmask 1043456
    %v139 = vsel %vm137, %v130, 0
    %141 = vmatprep.subr.bf16.mxu0 0
    %142 = vmatpush1.bf16.msra.mxu0 %v128
    %143 = vmatprep.subr.bf16.mxu0 0
    %144 = vmatpush1.bf16.msra.mxu0 %v129
    %145 = vmatprep.subr.bf16.mxu0 0
    %146 = vmatpush1.bf16.msra.mxu0 %v139
    %147 = vmatprep.subr.bf16.mxu0 0
    %148 = vmatpush1.bf16.msra.mxu0 0
    %149 = vmatprep.subr.bf16.mxu0 0
    %150 = vmatpush1.bf16.msra.mxu0 0
    %151 = vmatprep.subr.bf16.mxu0 0
    %152 = vmatpush1.bf16.msra.mxu0 0
    %153 = vmatprep.subr.bf16.mxu0 0
    %154 = vmatpush1.bf16.msra.mxu0 0
    %155 = vmatprep.subr.bf16.mxu0 0
    %156 = vmatpush1.bf16.msra.mxu0 0
    %157 = vmatprep.subr.bf16.mxu0 0
    %158 = vmatpush1.bf16.msra.mxu0 0
    %159 = vmatprep.subr.bf16.mxu0 0
    %160 = vmatpush1.bf16.msra.mxu0 0
    %161 = vmatprep.subr.bf16.mxu0 0
    %162 = vmatpush1.bf16.msra.mxu0 0
    %163 = vmatprep.subr.bf16.mxu0 0
    %164 = vmatpush1.bf16.msra.mxu0 0
    %165 = vmatprep.subr.bf16.mxu0 0
    %166 = vmatpush1.bf16.msra.mxu0 0
    %167 = vmatprep.subr.bf16.mxu0 0
    %168 = vmatpush1.bf16.msra.mxu0 0
    %169 = vmatprep.subr.bf16.mxu0 0
    %170 = vmatpush1.bf16.msra.mxu0 0
    %171 = vmatprep.subr.bf16.mxu0 0
    %172 = vmatpush1.bf16.msra.mxu0 0
    %173 = vmatprep.mubr.bf16.mxu0 0
    %174 = vmatmul.mubr.bf16.gmra.mrb[0].mxu0 %v135
    %v175 = vpop.f32.mrb[0].mxu0
    %v176 = vadd.f32 %v116, %v175
    %v177 = vpop.f32.mrb[0].mxu0
    %v178 = vpop.f32.mrb[0].mxu0
    %v179 = vadd.f32 %v116, %v178
    %v180 = vpop.f32.mrb[0].mxu0
    %181 = vdwg.mxu0
    %v182 = vmax.f32 %v176, 0.0
    %v183 = vmax.f32 %v179, 0.0
    %v184 = vpack.c.bf16 %v183, %v182
    %v185 = vld [vmem:[%s5] sm:$0x3]
    %v186 = vld [vmem:[%s6] sm:$0x1]
    %v188 = vlaneseq
    %v189 = vshrl.u32 %v188, 7
    %v190 = vsub.s32 0, %v189
    %v191 = vrot.slane %v186, %v190
    %vm193 = vcmask 31744
    %v195 = vsel %vm193, %v184, 0
    %vm197 = vcmask 1041408
    %v199 = vsel %vm197, %v185, 0
    %201 = vmatprep.subr.bf16.mxu0 0
    %202 = vmatpush1.bf16.msra.mxu0 %v199
    %203 = vmatprep.subr.bf16.mxu0 0
    %204 = vmatpush1.bf16.msra.mxu0 0
    %205 = vmatprep.subr.bf16.mxu0 0
    %206 = vmatpush1.bf16.msra.mxu0 0
    %207 = vmatprep.subr.bf16.mxu0 0
    %208 = vmatpush1.bf16.msra.mxu0 0
    %209 = vmatprep.subr.bf16.mxu0 0
    %210 = vmatpush1.bf16.msra.mxu0 0
    %211 = vmatprep.subr.bf16.mxu0 0
    %212 = vmatpush1.bf16.msra.mxu0 0
    %213 = vmatprep.subr.bf16.mxu0 0
    %214 = vmatpush1.bf16.msra.mxu0 0
    %215 = vmatprep.subr.bf16.mxu0 0
    %216 = vmatpush1.bf16.msra.mxu0 0
    %217 = vmatprep.subr.bf16.mxu0 0
    %218 = vmatpush1.bf16.msra.mxu0 0
    %219 = vmatprep.subr.bf16.mxu0 0
    %220 = vmatpush1.bf16.msra.mxu0 0
    %221 = vmatprep.subr.bf16.mxu0 0
    %222 = vmatpush1.bf16.msra.mxu0 0
    %223 = vmatprep.subr.bf16.mxu0 0
    %224 = vmatpush1.bf16.msra.mxu0 0
    %225 = vmatprep.subr.bf16.mxu0 0
    %226 = vmatpush1.bf16.msra.mxu0 0
    %227 = vmatprep.subr.bf16.mxu0 0
    %228 = vmatpush1.bf16.msra.mxu0 0
    %229 = vmatprep.subr.bf16.mxu0 0
    %230 = vmatpush1.bf16.msra.mxu0 0
    %231 = vmatprep.subr.bf16.mxu0 0
    %232 = vmatpush1.bf16.msra.mxu0 0
    %233 = vmatprep.mubr.bf16.mxu0 0
    %234 = vmatmul.mubr.bf16.gmra.mrb[0].mxu0 %v195
    %v235 = vpop.f32.mrb[0].mxu0
    %v236 = vadd.f32 %v191, %v235
    %v237 = vpop.f32.mrb[0].mxu0
    %v238 = vpop.f32.mrb[0].mxu0
    %v239 = vadd.f32 %v191, %v238
    %v240 = vpop.f32.mrb[0].mxu0
    %241 = vdwg.mxu0
    %242 = vst [vmem:[#allocation2] sm:$0xff] %v236
    %243 = vst [vmem:[#allocation2 + $0x8] sm:$0xff] %v239
    // Predicated region
    $region30: #{tpu_custom_call.1} parent=1 // pred_check
      _
    $region31: #{tpu_custom_call.1} parent=1 // pred_check_branch
      %245 = sbr.rel (0) target = $region33
    $region32: #{tpu_custom_call.1} parent=1 // pred_region
      %s247 = ssub.s32 256, 256
      %248 = vsyncadd [#allocation3], %s247
      %s249 = sshll.u32 [#allocation2], 4
      %s250 = int_to_ptr.vmem [resolvable:$true] %s249
      %255 = dma.vmem_to_hbm [thread:$0]  %s250, 256, %s7, [#allocation3], 128, 128, 8
    $region33: #{tpu_custom_call.1} parent=1 // pred_fallthru
      _
    // Predicated region
    $region34: #{tpu_custom_call.1} parent=1 // pred_check
      _
    $region35: #{tpu_custom_call.1} parent=1 // pred_check_branch
      %257 = sbr.rel (0) target = $region37
    $region36: #{tpu_custom_call.1} parent=1 // pred_region
      %258 = dma.done [#allocation3], 256
    $region37: #{tpu_custom_call.1} parent=1 // pred_fallthru
      _
    %259 = vsyncpa [#allocation3], 1

</llo_original>
